<compile_context>
chip_gen: v7x
topology: tpu7x:2x2x1
jax: 0.10.0
libtpu: 0.0.40
codegen_flags: <defaults>
</compile_context>

<pallas_src>
import functools
import math

import jax
import jax.numpy as jnp
from jax.experimental import pallas as pl
from jax.experimental.pallas import tpu as pltpu


# ---------------------------------------------------------------------------
# Hardware sizing helpers (generation aware: 128 MiB VMEM v5e/v6e, 64 MiB v7x)
# ---------------------------------------------------------------------------
@functools.lru_cache(maxsize=1)
def _vmem_capacity_bytes():
    try:
        cap = getattr(pltpu.get_tpu_info(), "vmem_capacity_bytes", None)
        if cap:
            return int(cap)
    except Exception:
        pass
    try:
        kind = jax.devices()[0].device_kind.lower()
        if ("v5 lite" in kind or "v5e" in kind or "v5litepod" in kind
                or "v6" in kind or "trillium" in kind):
            return 128 * 1024 * 1024
    except Exception:
        pass
    return 64 * 1024 * 1024  # conservative default (v7x per-TensorCore)


def _vmem_limit_bytes():
    # Leave ~25% headroom for compiler-internal scratch / pipelining.
    return int(_vmem_capacity_bytes() * 3 // 4)


def _round_up(x, m):
    return ((x + m - 1) // m) * m


def _pick_tile(dim, target, align):
    """Largest tile <= target that divides `dim` and is a multiple of `align`;
    falls back to the full dimension (always a legal BlockSpec)."""
    if dim <= target:
        return dim
    t = (target // align) * align
    while t >= align:
        if dim % t == 0:
            return t
        t -= align
    return dim


# ---------------------------------------------------------------------------
# Matmul + bias:  out[M, N] = x[M, K] @ w[K, N] + b[N]
#   * weight-resident variant: the whole (K, N) weight stays in VMEM and is
#     DMA'd from HBM exactly once (block index is constant across the M grid),
#     instead of being re-streamed M//tm times.
#   * k-tiled fallback with an f32 accumulator when the weight doesn't fit.
# ---------------------------------------------------------------------------
def _matmul_bias_resident_kernel(x_ref, w_ref, b_ref, o_ref):
    acc = jnp.dot(x_ref[...], w_ref[...], preferred_element_type=jnp.float32)
    o_ref[...] = (acc + b_ref[...].astype(jnp.float32)).astype(o_ref.dtype)


def _matmul_bias_tiled_kernel(x_ref, w_ref, b_ref, o_ref, acc_ref):
    @pl.when(pl.program_id(2) == 0)
    def _():
        acc_ref[...] = jnp.zeros_like(acc_ref)

    acc_ref[...] += jnp.dot(x_ref[...], w_ref[...],
                            preferred_element_type=jnp.float32)

    @pl.when(pl.program_id(2) == pl.num_programs(2) - 1)
    def _():
        o_ref[...] = (acc_ref[...] + b_ref[...].astype(jnp.float32)).astype(o_ref.dtype)


def matmul_bias(x, w, b):
    """x: (M, K), w: (K, N), b: (N,) -> (M, N) = x @ w + b"""
    M, K = x.shape
    K2, N = w.shape
    assert K == K2 and b.shape == (N,)
    b2 = b.reshape(1, N)
    dsize = x.dtype.itemsize
    vmem_limit = _vmem_limit_bytes()
    budget = int(vmem_limit * 0.85)

    # --- weight-resident path (count 2x for Pallas' double-buffer alloc) ----
    w_bytes = 2 * dsize * K * N + 2 * dsize * N
    if w_bytes <= budget // 2:
        per_row = 2 * dsize * K + 2 * dsize * N + 4 * N  # x + out (dbl buf) + f32 acc
        tm_max = max(8, ((budget - w_bytes) // per_row) // 8 * 8)
        tm = _pick_tile(M, min(tm_max, 2048), 8)
        return pl.pallas_call(
            _matmul_bias_resident_kernel,
            out_shape=jax.ShapeDtypeStruct((M, N), x.dtype),
            grid_spec=pltpu.PrefetchScalarGridSpec(
                num_scalar_prefetch=0,
                grid=(M // tm,),
                in_specs=[
                    pl.BlockSpec((tm, K), lambda i: (i, 0)),
                    pl.BlockSpec((K, N), lambda i: (0, 0)),   # resident across M
                    pl.BlockSpec((1, N), lambda i: (0, 0)),
                ],
                out_specs=pl.BlockSpec((tm, N), lambda i: (i, 0)),
            ),
            compiler_params=pltpu.CompilerParams(
                dimension_semantics=("parallel",),
                vmem_limit_bytes=vmem_limit,
            ),
        )(x, w, b2)

    # --- k-tiled fallback ----------------------------------------------------
    if _vmem_capacity_bytes() >= 100 * 1024 * 1024:   # v5e / v6e (128 MiB VMEM)
        tm0, tn0, tk0 = 512, 1024, 512
    else:                                             # v7x (64 MiB VMEM)
        tm0, tn0, tk0 = 256, 512, 512
    tm = _pick_tile(M, tm0, 8)
    tn = _pick_tile(N, tn0, 128)
    tk = _pick_tile(K, tk0, 128)
    return pl.pallas_call(
        _matmul_bias_tiled_kernel,
        out_shape=jax.ShapeDtypeStruct((M, N), x.dtype),
        grid_spec=pltpu.PrefetchScalarGridSpec(
            num_scalar_prefetch=0,
            grid=(M // tm, N // tn, K // tk),
            in_specs=[
                pl.BlockSpec((tm, tk), lambda i, j, k: (i, k)),
                pl.BlockSpec((tk, tn), lambda i, j, k: (k, j)),
                pl.BlockSpec((1, tn), lambda i, j, k: (0, j)),
            ],
            out_specs=pl.BlockSpec((tm, tn), lambda i, j, k: (i, j)),
            scratch_shapes=[pltpu.VMEM((tm, tn), jnp.float32)],
        ),
        compiler_params=pltpu.CompilerParams(
            dimension_semantics=("parallel", "parallel", "arbitrary"),
            vmem_limit_bytes=vmem_limit,
        ),
    )(x, w, b2)


# ---------------------------------------------------------------------------
# Scaled dot-product attention.
# Heads are packed P-per-block along the last (lane) dim so the VMEM blocks /
# HBM DMAs are lane-dense even when head_dim < 128.
# q: (G, Sq, P*Dh), k/v: (G, Skv, P*Dh) -> o: (G, Sq, P*Dh),  G = B * H / P.
# ---------------------------------------------------------------------------
def _sdpa_kernel(q_ref, k_ref, v_ref, o_ref, *, scale, heads_per_block, head_dim):
    q = q_ref[...]
    k = k_ref[...]
    v = v_ref[...]
    outs = []
    for p in range(heads_per_block):
        sl = slice(p * head_dim, (p + 1) * head_dim)
        qp, kp, vp = q[:, :, sl], k[:, :, sl], v[:, :, sl]
        # MXU in native dtype (bf16/f32), f32 accumulation; softmax math in f32.
        s = jnp.einsum("bqd,bkd->bqk", qp, kp,
                       preferred_element_type=jnp.float32) * scale
        m = jnp.max(s, axis=-1, keepdims=True)
        e = jnp.exp(s - m)
        l = jnp.sum(e, axis=-1, keepdims=True)
        inv_l = pl.reciprocal(l, approx=True)                 # EUP slot, ~free
        o = jnp.einsum("bqk,bkd->bqd", e.astype(vp.dtype), vp,
                       preferred_element_type=jnp.float32) * inv_l
        outs.append(o)
    o_full = outs[0] if heads_per_block == 1 else jnp.concatenate(outs, axis=-1)
    o_ref[...] = o_full.astype(o_ref.dtype)


def sdpa(q, k, v, *, scale, heads_per_block, head_dim):
    G, Sq, Dp = q.shape
    _, Skv, _ = k.shape
    vmem_limit = _vmem_limit_bytes()
    budget = int(vmem_limit * 0.42)

    # dtype- and padding-aware per-group VMEM estimate
    isz = q.dtype.itemsize
    sub = {4: 8, 2: 16, 1: 32}.get(isz, 8)
    d_pad = _round_up(Dp, 128)
    sq_p, skv_p = _round_up(Sq, sub), _round_up(Skv, sub)
    blk = 2 * isz * (2 * sq_p * d_pad + 2 * skv_p * d_pad)        # q/o + k/v, dbl-buffered
    f32w = 4 * heads_per_block * (2 * _round_up(Sq, 8) * _round_up(Skv, 128)
                                  + _round_up(Sq, 8) * _round_up(head_dim, 128))
    per_group = blk + f32w

    bh_tile = max(1, min(G, budget // max(per_group, 1)))
    if _vmem_capacity_bytes() <= 64 * 1024 * 1024 and G >= 2:
        # v7x: 2 TensorCores per chip -> keep >= 2 parallel grid steps.
        bh_tile = min(bh_tile, G // 2)
    while G % bh_tile:
        bh_tile -= 1

    return pl.pallas_call(
        functools.partial(_sdpa_kernel, scale=scale,
                          heads_per_block=heads_per_block, head_dim=head_dim),
        out_shape=jax.ShapeDtypeStruct((G, Sq, Dp), q.dtype),
        grid_spec=pltpu.PrefetchScalarGridSpec(
            num_scalar_prefetch=0,
            grid=(G // bh_tile,),
            in_specs=[
                pl.BlockSpec((bh_tile, Sq, Dp), lambda g: (g, 0, 0)),
                pl.BlockSpec((bh_tile, Skv, Dp), lambda g: (g, 0, 0)),
                pl.BlockSpec((bh_tile, Skv, Dp), lambda g: (g, 0, 0)),
            ],
            out_specs=pl.BlockSpec((bh_tile, Sq, Dp), lambda g: (g, 0, 0)),
        ),
        compiler_params=pltpu.CompilerParams(
            dimension_semantics=("parallel",),
            vmem_limit_bytes=vmem_limit,
        ),
    )(q, k, v)


# ---------------------------------------------------------------------------
# Full MultiheadAttention forward (default path).
# ---------------------------------------------------------------------------
# TODO(synk): prefix/prompt-pool attention, the _CG_tuning branch
# (LayerScale / Mlp / Conv1d compressors), attn_mask, dropout and
# need_weights are not implemented; this covers the default inference path
# (prefix=None, _CG_tuning=False, attn_mask=None, dropout_p=0.0).
def _heads_per_block(num_heads, head_dim, target_lanes=128):
    if head_dim >= target_lanes:
        return 1
    for cand in range(num_heads, 0, -1):
        if num_heads % cand == 0 and cand * head_dim <= target_lanes:
            return cand
    return 1


def multihead_attention_forward(query, key, value, *, num_heads,
                                in_proj_weight, in_proj_bias,
                                out_proj_weight, out_proj_bias):
    """query/key/value: (seq, batch, embed) — PyTorch MHA layout.
    Returns (attn_output of shape (tgt_len, batch, embed), None)."""
    S, B, E = query.shape
    Skv = key.shape[0]
    H = num_heads
    Dh = E // H
    assert Dh * H == E

    P = _heads_per_block(H, Dh)   # heads packed per kernel block (lane density)
    Hg = H // P
    Dp = P * Dh

    # input projection: F.linear(x, W, b) == x @ W.T + b
    if (key is query) and (value is query):
        # packed projection + single fused split/head-transpose pass
        qkv = matmul_bias(query.reshape(S * B, E), in_proj_weight.T, in_proj_bias)
        qkv = qkv.reshape(S, B, 3, Hg, P, Dh)
        qkv = jnp.transpose(qkv, (2, 1, 3, 0, 4, 5)).reshape(3, B * Hg, S, Dp)
        qh, kh, vh = qkv[0], qkv[1], qkv[2]
    else:
        w_q, w_k, w_v = jnp.split(in_proj_weight, 3, axis=0)
        b_q, b_k, b_v = jnp.split(in_proj_bias, 3, axis=0)

        def to_groups(t, L):
            t = t.reshape(L, B, Hg, P, Dh)
            return jnp.transpose(t, (1, 2, 0, 3, 4)).reshape(B * Hg, L, Dp)

        qh = to_groups(matmul_bias(query.reshape(S * B, E), w_q.T, b_q), S)
        kh = to_groups(matmul_bias(key.reshape(Skv * B, E), w_k.T, b_k), Skv)
        vh = to_groups(matmul_bias(value.reshape(Skv * B, E), w_v.T, b_v), Skv)

    # fused attention kernel
    oh = sdpa(qh, kh, vh, scale=1.0 / math.sqrt(Dh),
              heads_per_block=P, head_dim=Dh)          # (B*Hg, S, P*Dh)

    # (B*Hg, S, P*Dh) -> (S*B, E)  [matches permute(2,0,1,3).view(bsz*tgt_len, E)]
    attn = jnp.transpose(oh.reshape(B, Hg, S, P, Dh),
                         (2, 0, 1, 3, 4)).reshape(S * B, E)

    # output projection
    out = matmul_bias(attn, out_proj_weight.T, out_proj_bias).reshape(S, B, E)
    return out, None


if __name__ == "__main__":
    # Small shapes consistent with the module: seq=8, batch=2, embed=32, heads=4.
    S, B, E, H = 8, 2, 32, 4

    key0 = jax.random.PRNGKey(0)
    k_x, k_w_in, k_w_out = jax.random.split(key0, 3)

    query = jax.random.normal(k_x, (S, B, E), dtype=jnp.float32)

    # xavier_uniform_ init for in_proj_weight (3E, E); zero biases (as in the module)
    limit_in = math.sqrt(6.0 / (3 * E + E))
    in_proj_weight = jax.random.uniform(k_w_in, (3 * E, E), jnp.float32,
                                        -limit_in, limit_in)
    in_proj_bias = jnp.zeros((3 * E,), jnp.float32)

    limit_out = math.sqrt(1.0 / E)
    out_proj_weight = jax.random.uniform(k_w_out, (E, E), jnp.float32,
                                         -limit_out, limit_out)
    out_proj_bias = jnp.zeros((E,), jnp.float32)

    out, _ = multihead_attention_forward(
        query, query, query, num_heads=H,
        in_proj_weight=in_proj_weight, in_proj_bias=in_proj_bias,
        out_proj_weight=out_proj_weight, out_proj_bias=out_proj_bias)
    out = jax.block_until_ready(out)

    # ---- pure-JAX reference (same math as the PyTorch module, default path) ----
    def ref_forward(q_in):
        Dh = E // H
        qkv = q_in.reshape(S * B, E) @ in_proj_weight.T + in_proj_bias
        qp, kp, vp = jnp.split(qkv, 3, axis=-1)

        def heads(t):
            return jnp.transpose(t.reshape(S, B, H, Dh), (1, 2, 0, 3))

        qh, kh, vh = heads(qp), heads(kp), heads(vp)
        s = jnp.einsum("bhqd,bhkd->bhqk", qh, kh) / math.sqrt(Dh)
        p = jax.nn.softmax(s, axis=-1)
        o = jnp.einsum("bhqk,bhkd->bhqd", p, vh)
        attn = jnp.transpose(o, (2, 0, 1, 3)).reshape(S * B, E)
        return (attn @ out_proj_weight.T + out_proj_bias).reshape(S, B, E)

    ref = ref_forward(query)
    assert out.shape == ref.shape and out.dtype == ref.dtype
    err = float(jnp.max(jnp.abs(out - ref)))
    # slightly relaxed tolerance: softmax normalization uses the approximate
    # EUP reciprocal (pl.reciprocal(approx=True))
    assert jnp.allclose(out, ref, atol=2e-3, rtol=2e-3), f"max abs err {err}"

    print("KERNEL_OK")
</pallas_src>

<mosaic_0001>
module attributes {stable_mosaic.version = 11 : i64} {
  func.func @_matmul_bias_resident_kernel(%arg0: i32, %arg1: memref<16x32xf32, #tpu.memory_space<vmem>>, %arg2: memref<32x96xf32, #tpu.memory_space<vmem>>, %arg3: memref<1x96xf32, #tpu.memory_space<vmem>>, %arg4: memref<16x96xf32, #tpu.memory_space<vmem>>) attributes {dimension_semantics = [#tpu.dimension_semantics<parallel>], iteration_bounds = array<i64: 1>, scalar_prefetch = 0 : i64, scratch_operands = 0 : i64, tpu.core_type = #tpu.core_type<tc>, window_params = [{transform_indices = @transform_0, window_bounds = array<i64: 16, 32>}, {pipeline_mode = #tpu.pipeline_mode<synchronous>, transform_indices = @transform_1, window_bounds = array<i64: 32, 96>}, {pipeline_mode = #tpu.pipeline_mode<synchronous>, transform_indices = @transform_2, window_bounds = array<i64: 1, 96>}, {transform_indices = @transform_3, window_bounds = array<i64: 16, 96>}]} {
    %c0 = arith.constant 0 : index
    %c0_0 = arith.constant 0 : index
    %0 = vector.load %arg1[%c0, %c0_0] : memref<16x32xf32, #tpu.memory_space<vmem>>, vector<16x32xf32>
    %c0_1 = arith.constant 0 : index
    %c0_2 = arith.constant 0 : index
    %1 = vector.load %arg2[%c0_1, %c0_2] : memref<32x96xf32, #tpu.memory_space<vmem>>, vector<32x96xf32>
    %cst = arith.constant dense<0.000000e+00> : vector<16x96xf32>
    %2 = tpu.matmul %0, %1, %cst {dimension_numbers = #tpu.dot_dimension_numbers<[1], [0], [0], [1], [0, 0, 1, 1], [], []>} : vector<16x32xf32>, vector<32x96xf32>, vector<16x96xf32> -> vector<16x96xf32>
    %c0_3 = arith.constant 0 : index
    %c0_4 = arith.constant 0 : index
    %3 = vector.load %arg3[%c0_3, %c0_4] : memref<1x96xf32, #tpu.memory_space<vmem>>, vector<1x96xf32>
    %4 = vector.broadcast %3 : vector<1x96xf32> to vector<16x96xf32>
    %5 = arith.addf %2, %4 : vector<16x96xf32>
    %c0_5 = arith.constant 0 : index
    %c0_6 = arith.constant 0 : index
    %6 = vector.load %arg4[%c0_5, %c0_6] : memref<16x96xf32, #tpu.memory_space<vmem>>, vector<16x96xf32>
    tpu.vector_store %arg4[%c0_5, %c0_6], %5 {strides = array<i32>} : memref<16x96xf32, #tpu.memory_space<vmem>>, vector<16x96xf32>,
    return
  }
  func.func @transform_0(%arg0: i32) -> (i32, i32) {
    %c0_i32 = arith.constant 0 : i32
    %c0_i32_0 = arith.constant 0 : i32
    return %arg0, %c0_i32 : i32, i32
  }
  func.func @transform_1(%arg0: i32) -> (i32, i32) {
    %c0_i32 = arith.constant 0 : i32
    %c0_i32_0 = arith.constant 0 : i32
    %c0_i32_1 = arith.constant 0 : i32
    return %c0_i32, %c0_i32_0 : i32, i32
  }
  func.func @transform_2(%arg0: i32) -> (i32, i32) {
    %c0_i32 = arith.constant 0 : i32
    %c0_i32_0 = arith.constant 0 : i32
    %c0_i32_1 = arith.constant 0 : i32
    return %c0_i32, %c0_i32_0 : i32, i32
  }
  func.func @transform_3(%arg0: i32) -> (i32, i32) {
    %c0_i32 = arith.constant 0 : i32
    %c0_i32_0 = arith.constant 0 : i32
    return %arg0, %c0_i32 : i32, i32
  }
}

</mosaic_0001>

<llo_original>
// kernel: tpu_custom_call.1
$region0: #{tpu_custom_call.1}
  #allocation0 [shape = 'u32[]', space=smem, size = 0x4, offset = 0x4, fixed_abs, tag = 'smem constant byte address 0x4 - core index']
  #allocation1 [shape = 'u32[144,128]{1,0:T(1,128)}', space=vmem, size = 0x12000, scoped, tag = 'internal scratch']
  %s0 = inlined_call_operand.hbm [shape: f32[16,32], index: 0, kind: input, shape index: {}]
  %s1 = inlined_call_operand.hbm [shape: f32[32,96], index: 1, kind: input, shape index: {}]
  %s2 = inlined_call_operand.vmem [shape: f32[1,96], index: 2, kind: input, shape index: {}]
  %s3 = inlined_call_operand.hbm [shape: f32[16,96], index: 3, kind: output, shape index: {}]
  %s4 = sld [smem:[#allocation0]]
  $region30: #{tpu_custom_call.1} parent=0
    _
  %s6 = ssub.s32 1, %s4
  %s7 = scalar_select 0, %s6, %s4
  $region1: #{tpu_custom_call.1} parent=0
    #allocation2 [shape = 'u8[8192]{0}', space=vmem, size = 0x2000, scoped, tag = 'input window, operand 0, single buffered']
    #allocation3 [shape = 's32[1]{0}', space=sflag, size = 0x4, scoped, tag = 'scoped memory for tpu_custom_call.1']
    #allocation4 [shape = 's32[1]{0}', space=sflag, size = 0x4, scoped, tag = 'scoped memory for tpu_custom_call.1']
    #allocation5 [shape = 'u8[16384]{0}', space=vmem, size = 0x4000, scoped, tag = 'input window, operand 1, single buffered']
    #allocation6 [shape = 's32[1]{0}', space=sflag, size = 0x4, scoped, tag = 'scoped memory for tpu_custom_call.1']
    #allocation7 [shape = 'u8[8192]{0}', space=vmem, size = 0x2000, scoped, tag = 'output window, operand 0, single buffered']
    %8 = vsyncpa [#allocation3], 0
    %9 = vsyncpa [#allocation6], 0
    %10 = vsyncpa [#allocation4], 0
    // Predicated region
    $region2: #{tpu_custom_call.1} parent=1 // pred_check
      _
    $region3: #{tpu_custom_call.1} parent=1 // pred_check_branch
      %12 = sbr.rel (0) target = $region5
    $region4: #{tpu_custom_call.1} parent=1 // pred_region
      %s14 = ssub.s32 256, 256
      %15 = vsyncadd [#allocation3], %s14
      %s16 = sshll.u32 [#allocation2], 4
      %s17 = int_to_ptr.vmem [resolvable:$true] %s16
      %22 = dma.hbm_to_vmem [thread:$0]  %s0, 256, %s17, [#allocation3], 128, 128, 8
    $region5: #{tpu_custom_call.1} parent=1 // pred_fallthru
      _
    // Predicated region
    $region6: #{tpu_custom_call.1} parent=1 // pred_check
      _
    $region7: #{tpu_custom_call.1} parent=1 // pred_check_branch
      %24 = sbr.rel (0) target = $region9
    $region8: #{tpu_custom_call.1} parent=1 // pred_region
      %s26 = ssub.s32 512, 512
      %27 = vsyncadd [#allocation6], %s26
      %s28 = sshll.u32 [#allocation5], 4
      %s29 = int_to_ptr.vmem [resolvable:$true] %s28
      %34 = dma.hbm_to_vmem [thread:$0]  %s1, 512, %s29, [#allocation6], 128, 128, 8
    $region9: #{tpu_custom_call.1} parent=1 // pred_fallthru
      _
    // Predicated region
    $region10: #{tpu_custom_call.1} parent=1 // pred_check
      _
    $region11: #{tpu_custom_call.1} parent=1 // pred_check_branch
      %36 = sbr.rel (0) target = $region13
    $region12: #{tpu_custom_call.1} parent=1 // pred_region
      _
    $region13: #{tpu_custom_call.1} parent=1 // pred_fallthru
      _
    // Predicated region
    $region14: #{tpu_custom_call.1} parent=1 // pred_check
      _
    $region15: #{tpu_custom_call.1} parent=1 // pred_check_branch
      %38 = sbr.rel (0) target = $region17
    $region16: #{tpu_custom_call.1} parent=1 // pred_region
      %39 = dma.done [#allocation3], 256
    $region17: #{tpu_custom_call.1} parent=1 // pred_fallthru
      _
    // Predicated region
    $region18: #{tpu_custom_call.1} parent=1 // pred_check
      _
    $region19: #{tpu_custom_call.1} parent=1 // pred_check_branch
      %41 = sbr.rel (0) target = $region21
    $region20: #{tpu_custom_call.1} parent=1 // pred_region
      %42 = dma.done [#allocation6], 512
    $region21: #{tpu_custom_call.1} parent=1 // pred_fallthru
      _
    %v43 = vld [vmem:[#allocation2] sm:$0xff]
    %v44 = vld [vmem:[#allocation2 + $0x8] sm:$0xff]
    %v45 = vld [vmem:[#allocation5] sm:$0xff]
    %v46 = vld [vmem:[#allocation5 + $0x8] sm:$0xff]
    %v47 = vld [vmem:[#allocation5 + $0x10] sm:$0xff]
    %v48 = vld [vmem:[#allocation5 + $0x18] sm:$0xff]
    %v49 = vld [vmem:[%s2] sm:$0x1]
    %v51 = vlaneseq
    %v52 = vshrl.u32 %v51, 7
    %v53 = vsub.s32 0, %v52
    %v54 = vrot.slane %v49, %v53
    %vm56 = vcmask 261120
    %v58 = vsel %vm56, %v43, 0
    %v61 = vsel %vm56, %v44, 0
    %63 = vmatprep.subr.mxu0 0.0
    %64 = vmatpush1.msra.mxu0 %v45
    %65 = vmatprep.subr.mxu0 0.0
    %66 = vmatpush1.msra.mxu0 %v46
    %67 = vmatprep.subr.mxu0 0.0
    %68 = vmatpush1.msra.mxu0 %v47
    %69 = vmatprep.subr.mxu0 0.0
    %70 = vmatpush1.msra.mxu0 %v48
    %71 = vmatprep.subr.mxu0 0.0
    %72 = vmatpush1.msra.mxu0 0.0
    %73 = vmatprep.subr.mxu0 0.0
    %74 = vmatpush1.msra.mxu0 0.0
    %75 = vmatprep.subr.mxu0 0.0
    %76 = vmatpush1.msra.mxu0 0.0
    %77 = vmatprep.subr.mxu0 0.0
    %78 = vmatpush1.msra.mxu0 0.0
    %79 = vmatprep.subr.mxu0 0.0
    %80 = vmatpush1.msra.mxu0 0.0
    %81 = vmatprep.subr.mxu0 0.0
    %82 = vmatpush1.msra.mxu0 0.0
    %83 = vmatprep.subr.mxu0 0.0
    %84 = vmatpush1.msra.mxu0 0.0
    %85 = vmatprep.subr.mxu0 0.0
    %86 = vmatpush1.msra.mxu0 0.0
    %87 = vmatprep.subr.mxu0 0.0
    %88 = vmatpush1.msra.mxu0 0.0
    %89 = vmatprep.subr.mxu0 0.0
    %90 = vmatpush1.msra.mxu0 0.0
    %91 = vmatprep.subr.mxu0 0.0
    %92 = vmatpush1.msra.mxu0 0.0
    %93 = vmatprep.subr.mxu0 0.0
    %94 = vmatpush1.msra.mxu0 0.0
    %95 = vmatprep.subr.mxu0 0.0
    %96 = vmatpush1.msra.mxu0 0.0
    %97 = vmatprep.subr.mxu0 0.0
    %98 = vmatpush1.msra.mxu0 0.0
    %99 = vmatprep.subr.mxu0 0.0
    %100 = vmatpush1.msra.mxu0 0.0
    %101 = vmatprep.subr.mxu0 0.0
    %102 = vmatpush1.msra.mxu0 0.0
    %103 = vmatprep.subr.mxu0 0.0
    %104 = vmatpush1.msra.mxu0 0.0
    %105 = vmatprep.subr.mxu0 0.0
    %106 = vmatpush1.msra.mxu0 0.0
    %107 = vmatprep.subr.mxu0 0.0
    %108 = vmatpush1.msra.mxu0 0.0
    %109 = vmatprep.subr.mxu0 0.0
    %110 = vmatpush1.msra.mxu0 0.0
    %111 = vmatprep.subr.mxu0 0.0
    %112 = vmatpush1.msra.mxu0 0.0
    %113 = vmatprep.subr.mxu0 0.0
    %114 = vmatpush1.msra.mxu0 0.0
    %115 = vmatprep.subr.mxu0 0.0
    %116 = vmatpush1.msra.mxu0 0.0
    %117 = vmatprep.subr.mxu0 0.0
    %118 = vmatpush1.msra.mxu0 0.0
    %119 = vmatprep.subr.mxu0 0.0
    %120 = vmatpush1.msra.mxu0 0.0
    %121 = vmatprep.subr.mxu0 0.0
    %122 = vmatpush1.msra.mxu0 0.0
    %123 = vmatprep.subr.mxu0 0.0
    %124 = vmatpush1.msra.mxu0 0.0
    %125 = vmatprep.subr.mxu0 0.0
    %126 = vmatpush1.msra.mxu0 0.0
    %127 = vmatprep.mubr.f32.mxu0 0.0
    %128 = vmatmul.mubr.f32.gmra.mrb[0].mxu0 %v58
    %v129 = vpop.f32.mrb[0].mxu0
    %v130 = vadd.f32 %v54, %v129
    %v131 = vpop.f32.mrb[0].mxu0
    %132 = vmatprep.mubr.f32.mxu0 0.0
    %133 = vmatmul.mubr.f32.gmra.mrb[0].mxu0 %v61
    %v134 = vpop.f32.mrb[0].mxu0
    %v135 = vadd.f32 %v54, %v134
    %v136 = vpop.f32.mrb[0].mxu0
    %137 = vdwg.mxu0
    %vm138 = vcmask 785408
    %139 = vst.msk [vmem:[#allocation7] sm:$0xff] %vm138, %v130
    %140 = vst.msk [vmem:[#allocation7 + $0x8] sm:$0xff] %vm138, %v135
    // Predicated region
    $region22: #{tpu_custom_call.1} parent=1 // pred_check
      _
    $region23: #{tpu_custom_call.1} parent=1 // pred_check_branch
      %142 = sbr.rel (0) target = $region25
    $region24: #{tpu_custom_call.1} parent=1 // pred_region
      %s144 = ssub.s32 256, 256
      %145 = vsyncadd [#allocation4], %s144
      %s146 = sshll.u32 [#allocation7], 4
      %s147 = int_to_ptr.vmem [resolvable:$true] %s146
      %152 = dma.vmem_to_hbm [thread:$0]  %s147, 256, %s3, [#allocation4], 128, 128, 8
    $region25: #{tpu_custom_call.1} parent=1 // pred_fallthru
      _
    // Predicated region
    $region26: #{tpu_custom_call.1} parent=1 // pred_check
      _
    $region27: #{tpu_custom_call.1} parent=1 // pred_check_branch
      %154 = sbr.rel (0) target = $region29
    $region28: #{tpu_custom_call.1} parent=1 // pred_region
      %155 = dma.done [#allocation4], 256
    $region29: #{tpu_custom_call.1} parent=1 // pred_fallthru
      _
    %156 = vsyncpa [#allocation3], 1
    %157 = vsyncpa [#allocation6], 1
    %158 = vsyncpa [#allocation4], 1

</llo_original>
